<compile_context>
chip_gen: v6e
topology: v6e:2x2x1
jax: 0.10.0
libtpu: 0.0.40
codegen_flags: <defaults>
</compile_context>

<pallas_src>
import functools
import math

import jax
import jax.numpy as jnp
from jax.experimental import pallas as pl
from jax.experimental.pallas import tpu as pltpu


# ---------------------------------------------------------------------------
# Tile helper: largest tile <= target that is the full dim or an `align`-
# multiple that divides the dim evenly (keeps every block exact).
# ---------------------------------------------------------------------------
def _pick_tile(dim, target, align):
    if dim <= target:
        return dim
    t = (target // align) * align
    while t >= align:
        if dim % t == 0:
            return t
        t -= align
    return dim  # fall back to full extent


# ---------------------------------------------------------------------------
# Tiled linear:  o = x @ W + b   (bf16 MXU matmul, f32 accumulation in VMEM)
# ---------------------------------------------------------------------------
def _linear_kernel(x_ref, w_ref, b_ref, o_ref, acc_ref):
    k = pl.program_id(2)

    @pl.when(k == 0)
    def _init():
        acc_ref[...] = jnp.zeros(acc_ref.shape, jnp.float32)

    acc_ref[...] += jnp.dot(x_ref[...].astype(jnp.bfloat16), w_ref[...],
                            preferred_element_type=jnp.float32)

    @pl.when(k == pl.num_programs(2) - 1)
    def _finalize():
        o_ref[...] = (acc_ref[...] + b_ref[...]).astype(o_ref.dtype)


def linear_pallas(x2d, w, b, *, tm_target=256, tn_target=256, tk_target=512):
    """x2d: (R, K) f32, w: (K, N), b: (N,) -> (R, N) in x2d.dtype."""
    R, K = x2d.shape
    K2, N = w.shape
    assert K == K2
    w = w.astype(jnp.bfloat16)           # halve weight DMA; MXU is bf16-native
    b = b.reshape(1, N).astype(jnp.float32)
    tm = _pick_tile(R, tm_target, 8)     # x/o blocks stay f32 -> 8-sublane align
    tn = _pick_tile(N, tn_target, 128)
    tk = _pick_tile(K, tk_target, 128)   # 128-aligned -> valid for bf16 W tiles
    grid = (R // tm, N // tn, K // tk)
    return pl.pallas_call(
        _linear_kernel,
        out_shape=jax.ShapeDtypeStruct((R, N), x2d.dtype),
        grid_spec=pltpu.PrefetchScalarGridSpec(
            num_scalar_prefetch=0,
            grid=grid,
            in_specs=[
                pl.BlockSpec((tm, tk), lambda i, j, k: (i, k)),
                pl.BlockSpec((tk, tn), lambda i, j, k: (k, j)),
                pl.BlockSpec((1, tn), lambda i, j, k: (0, j)),
            ],
            out_specs=pl.BlockSpec((tm, tn), lambda i, j, k: (i, j)),
            scratch_shapes=[pltpu.VMEM((tm, tn), jnp.float32)],
        ),
        compiler_params=pltpu.CompilerParams(
            dimension_semantics=("parallel", "parallel", "arbitrary")),
    )(x2d, w, b)


# ---------------------------------------------------------------------------
# Flash-style multi-head attention, heads folded into the block layout.
#   grid = (batch, q-tiles, kv-tiles); q/k/v blocks are (tile, D) slabs taken
#   directly from the (B*S, D) projection output; all `head` heads are handled
#   per grid step so accumulator / output stores are D lanes wide.
# ---------------------------------------------------------------------------
def _flash_mha_kernel(bias_ref, q_ref, k_ref, v_ref, o_ref,
                      m_sc, l_sc, acc_sc, *, head):
    ki = pl.program_id(2)

    @pl.when(ki == 0)
    def _init():
        m_sc[...] = jnp.full(m_sc.shape, -jnp.inf, jnp.float32)
        l_sc[...] = jnp.zeros(l_sc.shape, jnp.float32)
        acc_sc[...] = jnp.zeros(acc_sc.shape, jnp.float32)

    q = q_ref[...].astype(jnp.bfloat16)     # (tq, D); 1/sqrt(d_k) already in Wq
    k = k_ref[...].astype(jnp.bfloat16)     # (tk, D)
    v = v_ref[...].astype(jnp.bfloat16)     # (tk, D)
    bias = bias_ref[...]                    # (tq, tk) additive 0 / -1e9 (f32)

    d_k = q.shape[-1] // head
    for h in range(head):                   # static unroll: all heads per step
        lo, hi = h * d_k, (h + 1) * d_k
        # scores for head h: (tq, tk), f32, stays in registers/VMEM
        s = jax.lax.dot_general(q[:, lo:hi], k[:, lo:hi],
                                (((1,), (1,)), ((), ())),
                                preferred_element_type=jnp.float32)
        s = s + bias
        m_prev = m_sc[:, h:h + 1]
        m_new = jnp.maximum(m_prev, jnp.max(s, axis=-1, keepdims=True))
        alpha = jnp.exp(m_prev - m_new)
        p = jnp.exp(s - m_new)
        l_sc[:, h:h + 1] = alpha * l_sc[:, h:h + 1] + jnp.sum(
            p, axis=-1, keepdims=True)
        acc_sc[:, lo:hi] = alpha * acc_sc[:, lo:hi] + jnp.dot(
            p.astype(jnp.bfloat16), v[:, lo:hi],
            preferred_element_type=jnp.float32)
        m_sc[:, h:h + 1] = m_new

    @pl.when(ki == pl.num_programs(2) - 1)
    def _finalize():
        for h in range(head):
            lo, hi = h * d_k, (h + 1) * d_k
            acc_sc[:, lo:hi] = acc_sc[:, lo:hi] * pl.reciprocal(
                l_sc[:, h:h + 1], approx=True)
        o_ref[...] = acc_sc[...].astype(o_ref.dtype)   # one lane-dense (tq,D) store


def flash_mha_heads(q_arr, k_arr, v_arr, bias, *, B, Sq, Sk, D, head,
                    q_col=0, k_col=0, v_col=0,
                    tq_target=256, tk_target=512):
    """q/k/v_arr: (B*Sq, *) / (B*Sk, *) slabs; *_col = column BLOCK (width D)."""
    assert Sq % 8 == 0 and Sk % 8 == 0, "sequence lengths must be multiples of 8"
    assert D % 128 == 0, "d_model must be a multiple of 128 for lane-dense blocks"
    tq = _pick_tile(Sq, tq_target, 8)
    tk = _pick_tile(Sk, tk_target, 128)
    nq, nk = Sq // tq, Sk // tk
    kernel = functools.partial(_flash_mha_kernel, head=head)
    return pl.pallas_call(
        kernel,
        out_shape=jax.ShapeDtypeStruct((B * Sq, D), q_arr.dtype),
        grid_spec=pltpu.PrefetchScalarGridSpec(
            num_scalar_prefetch=0,
            grid=(B, nq, nk),
            in_specs=[
                pl.BlockSpec((tq, tk), lambda b, qi, ki: (qi, ki)),
                pl.BlockSpec((tq, D), lambda b, qi, ki: (b * nq + qi, q_col)),
                pl.BlockSpec((tk, D), lambda b, qi, ki: (b * nk + ki, k_col)),
                pl.BlockSpec((tk, D), lambda b, qi, ki: (b * nk + ki, v_col)),
            ],
            out_specs=pl.BlockSpec((tq, D), lambda b, qi, ki: (b * nq + qi, 0)),
            scratch_shapes=[
                pltpu.VMEM((tq, head), jnp.float32),   # running max, per head
                pltpu.VMEM((tq, head), jnp.float32),   # running sum, per head
                pltpu.VMEM((tq, D), jnp.float32),      # lane-dense accumulator
            ],
        ),
        compiler_params=pltpu.CompilerParams(
            dimension_semantics=("parallel", "parallel", "arbitrary")),
    )(bias, q_arr, k_arr, v_arr)


# ---------------------------------------------------------------------------
# MultiHeadeAttention.forward (eval mode)
# ---------------------------------------------------------------------------
def multi_head_attention(query, key, value, mask, params, head):
    Wq, bq, Wk, bk, Wv, bv, Wo, bo = params
    B, Sq, D = query.shape
    Sk = key.shape[1]
    assert D % head == 0
    d_k = D // head

    # Fold 1/sqrt(d_k) into the Q projection: ((xWq+bq)/sqrt(d_k)) @ k^T == scores.
    scale = 1.0 / math.sqrt(d_k)
    Wq = Wq * scale
    bq = bq * scale

    # Additive mask bias shared across batch & heads (mask.unsqueeze(0) semantics).
    # TODO(synk): per-batch / per-head masks would need an extra bias grid axis.
    bias = jnp.where(jnp.broadcast_to(mask, (Sq, Sk)) == 0,
                     jnp.float32(-1e9), jnp.float32(0.0))

    if key is query and value is query:
        # Self-attention: one fused (B*S, D) x (D, 3D) projection on the MXU;
        # the flash kernel reads q/k/v straight out of the packed result.
        Wqkv = jnp.concatenate([Wq, Wk, Wv], axis=1)        # (D, 3D)
        bqkv = jnp.concatenate([bq, bk, bv], axis=0)        # (3D,)
        qkv = linear_pallas(query.reshape(B * Sq, D), Wqkv, bqkv)   # (B*S, 3D)
        attn2d = flash_mha_heads(qkv, qkv, qkv, bias, B=B, Sq=Sq, Sk=Sk, D=D,
                                 head=head, q_col=0, k_col=1, v_col=2)
    else:
        q2d = linear_pallas(query.reshape(B * Sq, D), Wq, bq)
        k2d = linear_pallas(key.reshape(B * Sk, D), Wk, bk)
        v2d = linear_pallas(value.reshape(B * Sk, D), Wv, bv)
        attn2d = flash_mha_heads(q2d, k2d, v2d, bias, B=B, Sq=Sq, Sk=Sk, D=D,
                                 head=head)

    out = linear_pallas(attn2d, Wo, bo)                      # (B*Sq, D)
    return out.reshape(B, Sq, D)


# ---------------------------------------------------------------------------
# Pure-JAX f32 reference of the same math (torch semantics, eval mode)
# ---------------------------------------------------------------------------
def ref_mha(query, key, value, mask, params, head):
    Wq, bq, Wk, bk, Wv, bv, Wo, bo = params
    B, Sq, D = query.shape
    d_k = D // head

    def proj(x, W, b):
        y = x @ W + b
        return y.reshape(B, -1, head, d_k).transpose(0, 2, 1, 3)

    q = proj(query, Wq, bq)
    k = proj(key, Wk, bk)
    v = proj(value, Wv, bv)
    scores = jnp.einsum("bhqd,bhkd->bhqk", q, k) / jnp.sqrt(jnp.float32(d_k))
    scores = jnp.where(mask == 0, jnp.float32(-1e9), scores)
    p = jax.nn.softmax(scores, axis=-1)
    o = jnp.einsum("bhqk,bhkd->bhqd", p, v)
    o = o.transpose(0, 2, 1, 3).reshape(B, -1, D)
    return o @ Wo + bo


if __name__ == "__main__":
    # d_model=512 / head=8 as in the reference script; small batch & seq.
    B, S, D, HEAD = 2, 8, 512, 8

    root = jax.random.PRNGKey(0)
    ks = jax.random.split(root, 9)
    x = jax.random.normal(ks[0], (B, S, D), dtype=jnp.float32)

    def lin_init(kw, kb):
        W = jax.random.normal(kw, (D, D), dtype=jnp.float32) * (1.0 / math.sqrt(D))
        b = jax.random.normal(kb, (D,), dtype=jnp.float32) * 0.05
        return W, b

    Wq, bq = lin_init(ks[1], ks[2])
    Wk, bk = lin_init(ks[3], ks[4])
    Wv, bv = lin_init(ks[5], ks[6])
    Wo, bo = lin_init(ks[7], ks[8])
    params = (Wq, bq, Wk, bk, Wv, bv, Wo, bo)

    # Tolerance is bf16-matmul-level (kernel uses bf16 inputs w/ f32 accumulation,
    # reference is pure f32); still far tighter than any structural error.
    ATOL = RTOL = 5e-2

    # 1) All-zeros mask, as in the reference script (masked_fill everywhere ->
    #    uniform attention).
    mask_zeros = jnp.zeros((S, S), dtype=jnp.float32)
    out0 = multi_head_attention(x, x, x, mask_zeros, params, HEAD)
    out0 = jax.block_until_ready(out0)
    ref0 = ref_mha(x, x, x, mask_zeros, params, HEAD)
    assert out0.shape == (B, S, D)
    assert jnp.allclose(out0, ref0, atol=ATOL, rtol=RTOL), (
        f"zeros-mask mismatch, max abs err {float(jnp.max(jnp.abs(out0 - ref0)))}")

    # 2) Causal mask to exercise the masking / online-softmax path.
    mask_causal = jnp.tril(jnp.ones((S, S), dtype=jnp.float32))
    out1 = multi_head_attention(x, x, x, mask_causal, params, HEAD)
    out1 = jax.block_until_ready(out1)
    ref1 = ref_mha(x, x, x, mask_causal, params, HEAD)
    assert jnp.allclose(out1, ref1, atol=ATOL, rtol=RTOL), (
        f"causal-mask mismatch, max abs err {float(jnp.max(jnp.abs(out1 - ref1)))}")

    print("KERNEL_OK")
</pallas_src>

<mosaic_0001>
module attributes {stable_mosaic.version = 11 : i64} {
  func.func @_linear_kernel(%arg0: i32, %arg1: i32, %arg2: i32, %arg3: memref<16x512xf32, #tpu.memory_space<vmem>>, %arg4: memref<512x256xbf16, #tpu.memory_space<vmem>>, %arg5: memref<1x256xf32, #tpu.memory_space<vmem>>, %arg6: memref<16x256xf32, #tpu.memory_space<vmem>>, %arg7: memref<16x256xf32, #tpu.memory_space<vmem>>) attributes {dimension_semantics = [#tpu.dimension_semantics<parallel>, #tpu.dimension_semantics<parallel>, #tpu.dimension_semantics<arbitrary>], iteration_bounds = array<i64: 1, 6, 1>, scalar_prefetch = 0 : i64, scratch_operands = 1 : i64, tpu.core_type = #tpu.core_type<tc>, window_params = [{transform_indices = @transform_0, window_bounds = array<i64: 16, 512>}, {transform_indices = @transform_1, window_bounds = array<i64: 512, 256>}, {transform_indices = @transform_2, window_bounds = array<i64: 1, 256>}, {transform_indices = @transform_3, window_bounds = array<i64: 16, 256>}]} {
    %c0_i32 = arith.constant 0 : i32
    %0 = arith.cmpi eq, %arg2, %c0_i32 : i32
    %1 = arith.extui %0 : i1 to i32
    %c0_i32_0 = arith.constant 0 : i32
    %2 = arith.cmpi ne, %1, %c0_i32_0 : i32
    scf.if %2 {
      %cst_10 = arith.constant 0.000000e+00 : f32
      %13 = vector.broadcast %cst_10 : f32 to vector<16x256xf32>
      %c0_11 = arith.constant 0 : index
      %c0_12 = arith.constant 0 : index
      %14 = vector.load %arg7[%c0_11, %c0_12] : memref<16x256xf32, #tpu.memory_space<vmem>>, vector<16x256xf32>
      tpu.vector_store %arg7[%c0_11, %c0_12], %13 {strides = array<i32>} : memref<16x256xf32, #tpu.memory_space<vmem>>, vector<16x256xf32>,
    } else {
    }
    %c0 = arith.constant 0 : index
    %c0_1 = arith.constant 0 : index
    %3 = vector.load %arg7[%c0, %c0_1] : memref<16x256xf32, #tpu.memory_space<vmem>>, vector<16x256xf32>
    %c0_2 = arith.constant 0 : index
    %c0_3 = arith.constant 0 : index
    %4 = vector.load %arg3[%c0_2, %c0_3] : memref<16x512xf32, #tpu.memory_space<vmem>>, vector<16x512xf32>
    %5 = arith.truncf %4 : vector<16x512xf32> to vector<16x512xbf16>
    %c0_4 = arith.constant 0 : index
    %c0_5 = arith.constant 0 : index
    %6 = vector.load %arg4[%c0_4, %c0_5] : memref<512x256xbf16, #tpu.memory_space<vmem>>, vector<512x256xbf16>
    %cst = arith.constant dense<0.000000e+00> : vector<16x256xf32>
    %7 = tpu.matmul %5, %6, %cst {dimension_numbers = #tpu.dot_dimension_numbers<[1], [0], [0], [1], [0, 0, 1, 1], [], []>} : vector<16x512xbf16>, vector<512x256xbf16>, vector<16x256xf32> -> vector<16x256xf32>
    %8 = arith.addf %3, %7 : vector<16x256xf32>
    %c0_6 = arith.constant 0 : index
    %c0_7 = arith.constant 0 : index
    %9 = vector.load %arg7[%c0_6, %c0_7] : memref<16x256xf32, #tpu.memory_space<vmem>>, vector<16x256xf32>
    tpu.vector_store %arg7[%c0_6, %c0_7], %8 {strides = array<i32>} : memref<16x256xf32, #tpu.memory_space<vmem>>, vector<16x256xf32>,
    %c0_i32_8 = arith.constant 0 : i32
    %10 = arith.cmpi eq, %arg2, %c0_i32_8 : i32
    %11 = arith.extui %10 : i1 to i32
    %c0_i32_9 = arith.constant 0 : i32
    %12 = arith.cmpi ne, %11, %c0_i32_9 : i32
    scf.if %12 {
      %c0_10 = arith.constant 0 : index
      %c0_11 = arith.constant 0 : index
      %13 = vector.load %arg7[%c0_10, %c0_11] : memref<16x256xf32, #tpu.memory_space<vmem>>, vector<16x256xf32>
      %c0_12 = arith.constant 0 : index
      %c0_13 = arith.constant 0 : index
      %14 = vector.load %arg5[%c0_12, %c0_13] : memref<1x256xf32, #tpu.memory_space<vmem>>, vector<1x256xf32>
      %15 = vector.broadcast %14 : vector<1x256xf32> to vector<16x256xf32>
      %16 = arith.addf %13, %15 : vector<16x256xf32>
      %c0_14 = arith.constant 0 : index
      %c0_15 = arith.constant 0 : index
      %17 = vector.load %arg6[%c0_14, %c0_15] : memref<16x256xf32, #tpu.memory_space<vmem>>, vector<16x256xf32>
      tpu.vector_store %arg6[%c0_14, %c0_15], %16 {strides = array<i32>} : memref<16x256xf32, #tpu.memory_space<vmem>>, vector<16x256xf32>,
    } else {
    }
    return
  }
  func.func @transform_0(%arg0: i32, %arg1: i32, %arg2: i32) -> (i32, i32) {
    %c0_i32 = arith.constant 0 : i32
    return %arg0, %arg2 : i32, i32
  }
  func.func @transform_1(%arg0: i32, %arg1: i32, %arg2: i32) -> (i32, i32) {
    %c0_i32 = arith.constant 0 : i32
    return %arg2, %arg1 : i32, i32
  }
  func.func @transform_2(%arg0: i32, %arg1: i32, %arg2: i32) -> (i32, i32) {
    %c0_i32 = arith.constant 0 : i32
    %c0_i32_0 = arith.constant 0 : i32
    return %c0_i32, %arg1 : i32, i32
  }
  func.func @transform_3(%arg0: i32, %arg1: i32, %arg2: i32) -> (i32, i32) {
    %c0_i32 = arith.constant 0 : i32
    return %arg0, %arg1 : i32, i32
  }
}

</mosaic_0001>

<llo_original>
// kernel: tpu_custom_call.1
$region0: #{tpu_custom_call.1}
  #allocation0 [shape = 'u32[]', space=smem, size = 0x4, offset = 0x4, fixed_abs, tag = 'smem constant byte address 0x4 - core index']
  #allocation1 [shape = 'u32[144,128]{1,0:T(1,128)}', space=vmem, size = 0x12000, scoped, tag = 'internal scratch']
  #allocation2 [shape = 'f32[16,256]{1,0:T(8,128)}', space=vmem, size = 0x4000, scoped, tag = 'scratch operand']
  %s0 = inlined_call_operand.hbm [shape: f32[16,512], index: 0, kind: input, shape index: {}]
  %s1 = inlined_call_operand.hbm [shape: bf16[512,1536], index: 1, kind: input, shape index: {}]
  %s2 = inlined_call_operand.hbm [shape: f32[1,1536], index: 2, kind: input, shape index: {}]
  %s3 = inlined_call_operand.hbm [shape: f32[16,1536], index: 3, kind: output, shape index: {}]
  %s4 = sld [smem:[#allocation0]]
  $region65: #{tpu_custom_call.1} parent=0
    _
  %s6 = ssub.s32 1, %s4
  %s7 = scalar_select 0, %s6, %s4
  $region1: #{tpu_custom_call.1} parent=0
    #allocation3 [shape = 'u8[32768]{0}', space=vmem, size = 0x8000, scoped, tag = 'input window, operand 0, single buffered']
    #allocation4 [shape = 's32[2]{0}', space=sflag, size = 0x8, scoped, tag = 'scoped memory for tpu_custom_call.1']
    #allocation5 [shape = 's32[2]{0}', space=sflag, size = 0x8, scoped, tag = 'scoped memory for tpu_custom_call.1']
    #allocation6 [shape = 'u8[524288]{0}', space=vmem, size = 0x80000, scoped, tag = 'input window, operand 1']
    #allocation7 [shape = 's32[2]{0}', space=sflag, size = 0x8, scoped, tag = 'scoped memory for tpu_custom_call.1']
    #allocation8 [shape = 'u8[2048]{0}', space=vmem, size = 0x800, scoped, tag = 'input window, operand 2']
    #allocation9 [shape = 'u8[32768]{0}', space=vmem, size = 0x8000, scoped, tag = 'output window, operand 0']
    %8 = vsyncpa [#allocation4], 0
    %9 = vsyncpa [#allocation7], 0
    %s10 = scalar_lea.sflag [#allocation7], 1
    %11 = vsyncpa %s10, 0
    %12 = vsyncpa [#allocation5], 0
    %s13 = scalar_lea.sflag [#allocation5], 1
    %14 = vsyncpa %s13, 0
    loop: start=0, step=1, limit=8
    $region2: #{tpu_custom_call.1} parent=1 // loop_pre_header
      _
    $region3: #{tpu_custom_call.1} parent=1 // loop_header
      %s16 = sphi 0, %s20
      %p17 = scmp.ge.s32.totalorder %s16, 8
      %s23 = sphi 0, %s42
      %s24 = sphi 0, %s38
      %s25 = sphi 0, %s34
      %s26 = sphi 0, %s23
      %s27 = sphi 0, %s24
      %s28 = sphi 0, %s25
      %s29 = sphi 0, %s26
      %s30 = sphi 0, %s27
      %s31 = sphi 0, %s28
      %s47 = sphi 0, %s49
      %s50 = sphi 0, %s47
      %s51 = sphi 0, %s50
      %s67 = sphi 0, %s51
      %s75 = sphi 0, %s77
      %s78 = sphi 0, %s75
      %s79 = sphi 0, %s78
      %s95 = sphi 0, %s79
      %s101 = sphi 0, %s103
      %s104 = sphi 0, %s101
      %s105 = sphi 0, %s104
      %s121 = sphi 0, %s105
      %s129 = sphi 0, %s131
      %s132 = sphi 0, %s129
      %s133 = sphi 0, %s132
      %s149 = sphi 0, %s133
    $region4: #{tpu_custom_call.1} parent=1 // loop_header_branch
      %19 = sbr.rel (%p17) target = $region8
    $region5: #{tpu_custom_call.1} parent=1 // loop_body
      %s21 = ssub.s32 %s16, 1
      %s22 = ssub.s32 %s16, 2
      %s32 = sadd.s32 1, %s25
      %p33 = scmp.ge.s32.totalorder %s32, 1
      %s34 = scalar_select %p33, 0, %s32
      %s35 = sadd.s32 1, %s24
      %s36 = scalar_select %p33, %s35, %s24
      %p37 = scmp.ge.s32.totalorder %s36, 6
      %s38 = scalar_select %p37, 0, %s36
      %s39 = sadd.s32 1, %s23
      %s40 = scalar_select %p37, %s39, %s23
      %p41 = scmp.ge.s32.totalorder %s40, 1
      %s42 = scalar_select %p41, 0, %s40
      %s43 = ssub.s32 %s23, %s42
      %s44 = ssub.s32 %s25, %s34
      %s45 = sor.u32 %s43, %s44
      %p46 = scmp.eq.s32.totalorder %s45, 0
      %s48 = sadd.s32 %s47, 1
      %s49 = scalar_select %p46, %s47, %s48
      %p52 = pneg %p46
      %p53 = scmp.eq.s32.totalorder %s16, 5
      %p54 = por %p52, %p53
      %p55 = scmp.ne.s32.totalorder %s47, %s50
      %p56 = scmp.eq.s32.totalorder %s16, 0
      %p57 = por %p55, %p56
      %p58 = scmp.ne.s32.totalorder %s47, %s50
      %p59 = scmp.eq.s32.totalorder %s21, 5
      %p60 = por %p58, %p59
      %p61 = scmp.ne.s32.totalorder %s50, %s51
      %p62 = scmp.eq.s32.totalorder %s21, 0
      %p63 = por %p61, %p62
      %p64 = scmp.ne.s32.totalorder %s50, %s51
      %p65 = scmp.eq.s32.totalorder %s22, 5
      %p66 = por %p64, %p65
      %p68 = scmp.ne.s32.totalorder %s51, %s67
      %p69 = scmp.eq.s32.totalorder %s22, 0
      %p70 = por %p68, %p69
      %s71 = ssub.s32 %s25, %s34
      %s72 = ssub.s32 %s24, %s38
      %s73 = sor.u32 %s71, %s72
      %p74 = scmp.eq.s32.totalorder %s73, 0
      %s76 = sadd.s32 %s75, 1
      %s77 = scalar_select %p74, %s75, %s76
      %p80 = pneg %p74
      %p81 = scmp.eq.s32.totalorder %s16, 5
      %p82 = por %p80, %p81
      %p83 = scmp.ne.s32.totalorder %s75, %s78
      %p84 = scmp.eq.s32.totalorder %s16, 0
      %p85 = por %p83, %p84
      %p86 = scmp.ne.s32.totalorder %s75, %s78
      %p87 = scmp.eq.s32.totalorder %s21, 5
      %p88 = por %p86, %p87
      %p89 = scmp.ne.s32.totalorder %s78, %s79
      %p90 = scmp.eq.s32.totalorder %s21, 0
      %p91 = por %p89, %p90
      %p92 = scmp.ne.s32.totalorder %s78, %s79
      %p93 = scmp.eq.s32.totalorder %s22, 5
      %p94 = por %p92, %p93
      %p96 = scmp.ne.s32.totalorder %s79, %s95
      %p97 = scmp.eq.s32.totalorder %s22, 0
      %p98 = por %p96, %p97
      %s99 = ssub.s32 %s24, %s38
      %p100 = scmp.eq.s32.totalorder %s99, 0
      %s102 = sadd.s32 %s101, 1
      %s103 = scalar_select %p100, %s101, %s102
      %p106 = pneg %p100
      %p107 = scmp.eq.s32.totalorder %s16, 5
      %p108 = por %p106, %p107
      %p109 = scmp.ne.s32.totalorder %s101, %s104
      %p110 = scmp.eq.s32.totalorder %s16, 0
      %p111 = por %p109, %p110
      %p112 = scmp.ne.s32.totalorder %s101, %s104
      %p113 = scmp.eq.s32.totalorder %s21, 5
      %p114 = por %p112, %p113
      %p115 = scmp.ne.s32.totalorder %s104, %s105
      %p116 = scmp.eq.s32.totalorder %s21, 0
      %p117 = por %p115, %p116
      %p118 = scmp.ne.s32.totalorder %s104, %s105
      %p119 = scmp.eq.s32.totalorder %s22, 5
      %p120 = por %p118, %p119
      %p122 = scmp.ne.s32.totalorder %s105, %s121
      %p123 = scmp.eq.s32.totalorder %s22, 0
      %p124 = por %p122, %p123
      %s125 = ssub.s32 %s23, %s42
      %s126 = ssub.s32 %s24, %s38
      %s127 = sor.u32 %s125, %s126
      %p128 = scmp.eq.s32.totalorder %s127, 0
      %s130 = sadd.s32 %s129, 1
      %s131 = scalar_select %p128, %s129, %s130
      %p134 = pneg %p128
      %p135 = scmp.eq.s32.totalorder %s16, 5
      %p136 = por %p134, %p135
      %p137 = scmp.ne.s32.totalorder %s129, %s132
      %p138 = scmp.eq.s32.totalorder %s16, 0
      %p139 = por %p137, %p138
      %p140 = scmp.ne.s32.totalorder %s129, %s132
      %p141 = scmp.eq.s32.totalorder %s21, 5
      %p142 = por %p140, %p141
      %p143 = scmp.ne.s32.totalorder %s132, %s133
      %p144 = scmp.eq.s32.totalorder %s21, 0
      %p145 = por %p143, %p144
      %p146 = scmp.ne.s32.totalorder %s132, %s133
      %p147 = scmp.eq.s32.totalorder %s22, 5
      %p148 = por %p146, %p147
      %p150 = scmp.ne.s32.totalorder %s133, %s149
      %p151 = scmp.eq.s32.totalorder %s22, 0
      %p152 = por %p150, %p151
      %p153 = scmp.le.s32.totalorder 1, %s16
      %p154 = scmp.lt.s32.totalorder %s16, 7
      %p155 = pnand %p153, %p154
      %p156 = pneg %p155
      // Predicated region
      $region9: #{tpu_custom_call.1} parent=5 // pred_check
        _
      $region10: #{tpu_custom_call.1} parent=5 // pred_check_branch
        %158 = sbr.rel (%p155) target = $region12
      $region11: #{tpu_custom_call.1} parent=5 // pred_region
        %s159 = ssub.s32 %s16, 1
        // Predicated region
        $region13: #{tpu_custom_call.1} parent=11 // pred_check
          %p160 = pneg %p63
        $region14: #{tpu_custom_call.1} parent=11 // pred_check_branch
          %162 = sbr.rel (%p160) target = $region16
        $region15: #{tpu_custom_call.1} parent=11 // pred_region
          %s163 = smul.u32 2, %s26
          %s164 = smul.u32 4, %s28
          %s166 = ssub.s32 1024, 1024
          %167 = vsyncadd [#allocation4], %s166
          %s168 = smul.addr %s163, 4
          %s169 = sadd.s32 %s164, %s168
          %s170 = smul.addr %s169, 128
          %s171 = scalar_lea.hbm %s0, %s170
          %s172 = sshll.u32 [#allocation3], 4
          %s173 = int_to_ptr.vmem [resolvable:$true] %s172
          %178 = dma.hbm_to_vmem [thread:$0]  %s171, 1024, %s173, [#allocation4], 512, 512, 32
        $region16: #{tpu_custom_call.1} parent=11 // pred_fallthru
          _
      $region12: #{tpu_custom_call.1} parent=5 // pred_fallthru
        _
      %p179 = scmp.lt.s32.totalorder %s16, 6
      // Predicated region
      $region17: #{tpu_custom_call.1} parent=5 // pred_check
        %p180 = pneg %p179
      $region18: #{tpu_custom_call.1} parent=5 // pred_check_branch
        %182 = sbr.rel (%p180) target = $region20
      $region19: #{tpu_custom_call.1} parent=5 // pred_region
        // Predicated region
        $region21: #{tpu_custom_call.1} parent=19 // pred_check
          %p183 = pneg %p85
        $region22: #{tpu_custom_call.1} parent=19 // pred_check_branch
          %185 = sbr.rel (%p183) target = $region24
        $region23: #{tpu_custom_call.1} parent=19 // pred_region
          %s186 = sand.u32 %s16, 1
          %s187 = scalar_lea.sflag [#allocation7], %s186
          %s188 = sand.u32 %s75, 1
          %s189 = smul.addr %s188, 512
          %s190 = scalar_lea.vmem [#allocation6], %s189
          %s191 = smul.u32 64, %s25
          %s192 = smul.u32 2, %s24
          %s194 = ssub.s32 8192, 8192
          %195 = vsyncadd %s187, %s194
          %s196 = smul.addr %s191, 12
          %s197 = sadd.s32 %s192, %s196
          %s198 = smul.addr %s197, 64
          %s199 = scalar_lea.hbm %s1, %s198
          %s200 = sshll.u32 %s190, 4
          %s201 = int_to_ptr.vmem [resolvable:$true] %s200
          %206 = dma.hbm_to_vmem [thread:$0]  %s199, 8192, %s201, %s187, 768, 128, 8
        $region24: #{tpu_custom_call.1} parent=19 // pred_fallthru
          _
        // Predicated region
        $region25: #{tpu_custom_call.1} parent=19 // pred_check
          %p207 = pneg %p111
        $region26: #{tpu_custom_call.1} parent=19 // pred_check_branch
          %209 = sbr.rel (%p207) target = $region28
        $region27: #{tpu_custom_call.1} parent=19 // pred_region
          %s210 = sand.u32 %s16, 1
          %s211 = scalar_lea.sflag [#allocation7], %s210
          %s212 = sand.u32 %s101, 1
          %s213 = smul.addr %s212, 2
          %s214 = scalar_lea.vmem [#allocation8], %s213
          %s215 = smul.u32 2, %s24
          %s217 = ssub.s32 32, 32
          %218 = vsyncadd %s211, %s217
          %s219 = smul.addr %s215, 16
          %s220 = scalar_lea.hbm %s2, %s219
          %s222 = sshll.u32 %s214, 4
          %s223 = int_to_ptr.vmem [resolvable:$true] %s222
          %225 = dma.hbm_to_vmem [thread:$0]  %s220, 32, %s223, %s211
        $region28: #{tpu_custom_call.1} parent=19 // pred_fallthru
          _
      $region20: #{tpu_custom_call.1} parent=5 // pred_fallthru
        _
      %p226 = scmp.le.s32.totalorder 1, %s16
      %p227 = scmp.lt.s32.totalorder %s16, 7
      %p228 = pnand %p226, %p227
      %p229 = pneg %p228
      // Predicated region
      $region29: #{tpu_custom_call.1} parent=5 // pred_check
        _
      $region30: #{tpu_custom_call.1} parent=5 // pred_check_branch
        %231 = sbr.rel (%p228) target = $region32
      $region31: #{tpu_custom_call.1} parent=5 // pred_region
        %s232 = ssub.s32 %s16, 1
        // Predicated region
        $region33: #{tpu_custom_call.1} parent=31 // pred_check
          %p233 = pneg %p63
        $region34: #{tpu_custom_call.1} parent=31 // pred_check_branch
          %235 = sbr.rel (%p233) target = $region36
        $region35: #{tpu_custom_call.1} parent=31 // pred_region
          %236 = dma.done [#allocation4], 1024
        $region36: #{tpu_custom_call.1} parent=31 // pred_fallthru
          _
        %s237 = sand.u32 %s21, 1
        %s238 = scalar_lea.sflag [#allocation7], %s237
        %s239 = sand.u32 %s78, 1
        %s240 = smul.addr %s239, 512
        %s241 = scalar_lea.vmem [#allocation6], %s240
        // Predicated region
        $region37: #{tpu_custom_call.1} parent=31 // pred_check
          %p242 = pneg %p91
        $region38: #{tpu_custom_call.1} parent=31 // pred_check_branch
          %244 = sbr.rel (%p242) target = $region40
        $region39: #{tpu_custom_call.1} parent=31 // pred_region
          %245 = dma.done %s238, 8192
        $region40: #{tpu_custom_call.1} parent=31 // pred_fallthru
          _
        %s246 = sand.u32 %s21, 1
        %s247 = scalar_lea.sflag [#allocation7], %s246
        %s248 = sand.u32 %s104, 1
        %s249 = smul.addr %s248, 2
        %s250 = scalar_lea.vmem [#allocation8], %s249
        // Predicated region
        $region41: #{tpu_custom_call.1} parent=31 // pred_check
          %p251 = pneg %p117
        $region42: #{tpu_custom_call.1} parent=31 // pred_check_branch
          %253 = sbr.rel (%p251) target = $region44
        $region43: #{tpu_custom_call.1} parent=31 // pred_region
          %254 = dma.done %s247, 32
        $region44: #{tpu_custom_call.1} parent=31 // pred_fallthru
          _
        %p255 = pneg %p63
        %p256 = pneg %p60
        %s257 = sand.u32 %s21, 1
        %s258 = scalar_lea.sflag [#allocation7], %s257
        %s259 = sand.u32 %s78, 1
        %s260 = smul.addr %s259, 512
        %s261 = scalar_lea.vmem [#allocation6], %s260
        %p262 = pneg %p91
        %p263 = pneg %p88
        %s264 = sand.u32 %s21, 1
        %s265 = scalar_lea.sflag [#allocation7], %s264
        %s266 = sand.u32 %s104, 1
        %s267 = smul.addr %s266, 2
        %s268 = scalar_lea.vmem [#allocation8], %s267
        %p269 = pneg %p117
        %p270 = pneg %p114
        %p271 = pneg %p145
        %p272 = pneg %p142
        %s273 = sand.u32 %s132, 1
        %s274 = scalar_lea.sflag [#allocation5], %s273
        %s275 = sand.u32 %s132, 1
        %s276 = smul.addr %s275, 32
        %s277 = scalar_lea.vmem [#allocation9], %s276
        %s278 = smul.u32 2, %s26
        %s279 = smul.u32 4, %s28
        %s280 = smul.u32 64, %s28
        %s281 = smul.u32 2, %s27
        %s282 = smul.u32 2, %s27
        %s283 = smul.u32 2, %s26
        %s284 = smul.u32 2, %s27
        %p285 = scmp.eq.s32.totalorder %s28, 0
        // Predicated region
        $region45: #{tpu_custom_call.1} parent=31 // pred_check
          %p286 = pneg %p285
        $region46: #{tpu_custom_call.1} parent=31 // pred_check_branch
          %288 = sbr.rel (%p286) target = $region48
        $region47: #{tpu_custom_call.1} parent=31 // pred_region
          %289 = vst [vmem:[#allocation2] sm:$0xff] 0.0
          %290 = vst [vmem:[#allocation2 + $0x8] sm:$0xff] 0.0
          %291 = vst [vmem:[#allocation2 + $0x10] sm:$0xff] 0.0
          %292 = vst [vmem:[#allocation2 + $0x18] sm:$0xff] 0.0
        $region48: #{tpu_custom_call.1} parent=31 // pred_fallthru
          _
        %v293 = vld [vmem:[#allocation2] sm:$0xff]
        %v294 = vld [vmem:[#allocation2 + $0x8] sm:$0xff]
        %v295 = vld [vmem:[#allocation2 + $0x10] sm:$0xff]
        %v296 = vld [vmem:[#allocation2 + $0x18] sm:$0xff]
        %v297 = vld [vmem:[#allocation3] sm:$0xff]
        %v298 = vld [vmem:[#allocation3 + $0x8] sm:$0xff]
        %v299 = vld [vmem:[#allocation3 + $0x10] sm:$0xff]
        %v300 = vld [vmem:[#allocation3 + $0x18] sm:$0xff]
        %v301 = vld [vmem:[#allocation3 + $0x20] sm:$0xff]
        %v302 = vld [vmem:[#allocation3 + $0x28] sm:$0xff]
        %v303 = vld [vmem:[#allocation3 + $0x30] sm:$0xff]
        %v304 = vld [vmem:[#allocation3 + $0x38] sm:$0xff]
        %v305 = vpack.c.bf16 %v301, %v297
        %v306 = vpack.c.bf16 %v302, %v298
        %v307 = vpack.c.bf16 %v303, %v299
        %v308 = vpack.c.bf16 %v304, %v300
        %v309 = vld [vmem:[%s241] sm:$0xff]
        %v310 = vld [vmem:[%s241 + $0x8] sm:$0xff]
        %v311 = vld [vmem:[%s241 + $0x10] sm:$0xff]
        %v312 = vld [vmem:[%s241 + $0x18] sm:$0xff]
        %v313 = vld [vmem:[%s241 + $0x20] sm:$0xff]
        %v314 = vld [vmem:[%s241 + $0x28] sm:$0xff]
        %v315 = vld [vmem:[%s241 + $0x30] sm:$0xff]
        %v316 = vld [vmem:[%s241 + $0x38] sm:$0xff]
        %v317 = vld [vmem:[%s241 + $0x40] sm:$0xff]
        %v318 = vld [vmem:[%s241 + $0x48] sm:$0xff]
        %v319 = vld [vmem:[%s241 + $0x50] sm:$0xff]
        %v320 = vld [vmem:[%s241 + $0x58] sm:$0xff]
        %v321 = vld [vmem:[%s241 + $0x60] sm:$0xff]
        %v322 = vld [vmem:[%s241 + $0x68] sm:$0xff]
        %v323 = vld [vmem:[%s241 + $0x70] sm:$0xff]
        %v324 = vld [vmem:[%s241 + $0x78] sm:$0xff]
        %v325 = vld [vmem:[%s241 + $0x80] sm:$0xff]
        %v326 = vld [vmem:[%s241 + $0x88] sm:$0xff]
        %v327 = vld [vmem:[%s241 + $0x90] sm:$0xff]
        %v328 = vld [vmem:[%s241 + $0x98] sm:$0xff]
        %v329 = vld [vmem:[%s241 + $0xa0] sm:$0xff]
        %v330 = vld [vmem:[%s241 + $0xa8] sm:$0xff]
        %v331 = vld [vmem:[%s241 + $0xb0] sm:$0xff]
        %v332 = vld [vmem:[%s241 + $0xb8] sm:$0xff]
        %v333 = vld [vmem:[%s241 + $0xc0] sm:$0xff]
        %v334 = vld [vmem:[%s241 + $0xc8] sm:$0xff]
        %v335 = vld [vmem:[%s241 + $0xd0] sm:$0xff]
        %v336 = vld [vmem:[%s241 + $0xd8] sm:$0xff]
        %v337 = vld [vmem:[%s241 + $0xe0] sm:$0xff]
        %v338 = vld [vmem:[%s241 + $0xe8] sm:$0xff]
        %v339 = vld [vmem:[%s241 + $0xf0] sm:$0xff]
        %v340 = vld [vmem:[%s241 + $0xf8] sm:$0xff]
        %v341 = vld [vmem:[%s241 + $0x100] sm:$0xff]
        %v342 = vld [vmem:[%s241 + $0x108] sm:$0xff]
        %v343 = vld [vmem:[%s241 + $0x110] sm:$0xff]
        %v344 = vld [vmem:[%s241 + $0x118] sm:$0xff]
        %v345 = vld [vmem:[%s241 + $0x120] sm:$0xff]
        %v346 = vld [vmem:[%s241 + $0x128] sm:$0xff]
        %v347 = vld [vmem:[%s241 + $0x130] sm:$0xff]
        %v348 = vld [vmem:[%s241 + $0x138] sm:$0xff]
        %v349 = vld [vmem:[%s241 + $0x140] sm:$0xff]
        %v350 = vld [vmem:[%s241 + $0x148] sm:$0xff]
        %v351 = vld [vmem:[%s241 + $0x150] sm:$0xff]
        %v352 = vld [vmem:[%s241 + $0x158] sm:$0xff]
        %v353 = vld [vmem:[%s241 + $0x160] sm:$0xff]
        %v354 = vld [vmem:[%s241 + $0x168] sm:$0xff]
        %v355 = vld [vmem:[%s241 + $0x170] sm:$0xff]
        %v356 = vld [vmem:[%s241 + $0x178] sm:$0xff]
        %v357 = vld [vmem:[%s241 + $0x180] sm:$0xff]
        %v358 = vld [vmem:[%s241 + $0x188] sm:$0xff]
        %v359 = vld [vmem:[%s241 + $0x190] sm:$0xff]
        %v360 = vld [vmem:[%s241 + $0x198] sm:$0xff]
        %v361 = vld [vmem:[%s241 + $0x1a0] sm:$0xff]
        %v362 = vld [vmem:[%s241 + $0x1a8] sm:$0xff]
        %v363 = vld [vmem:[%s241 + $0x1b0] sm:$0xff]
        %v364 = vld [vmem:[%s241 + $0x1b8] sm:$0xff]
        %v365 = vld [vmem:[%s241 + $0x1c0] sm:$0xff]
        %v366 = vld [vmem:[%s241 + $0x1c8] sm:$0xff]
        %v367 = vld [vmem:[%s241 + $0x1d0] sm:$0xff]
        %v368 = vld [vmem:[%s241 + $0x1d8] sm:$0xff]
        %v369 = vld [vmem:[%s241 + $0x1e0] sm:$0xff]
        %v370 = vld [vmem:[%s241 + $0x1e8] sm:$0xff]
        %v371 = vld [vmem:[%s241 + $0x1f0] sm:$0xff]
        %v372 = vld [vmem:[%s241 + $0x1f8] sm:$0xff]
        %v437 = vunpack.c.l.b16 %v309
        %v438 = vunpack.c.h.b16 %v309
        %v439 = vunpack.c.l.b16 %v310
        %v440 = vunpack.c.h.b16 %v310
        %v441 = vunpack.c.l.b16 %v311
        %v442 = vunpack.c.h.b16 %v311
        %v443 = vunpack.c.l.b16 %v312
        %v444 = vunpack.c.h.b16 %v312
        %v445 = vunpack.c.l.b16 %v313
        %v446 = vunpack.c.h.b16 %v313
        %v447 = vunpack.c.l.b16 %v314
        %v448 = vunpack.c.h.b16 %v314
        %v449 = vunpack.c.l.b16 %v315
        %v450 = vunpack.c.h.b16 %v315
        %v451 = vunpack.c.l.b16 %v316
        %v452 = vunpack.c.h.b16 %v316
        %v453 = vunpack.c.l.b16 %v317
        %v454 = vunpack.c.h.b16 %v317
        %v455 = vunpack.c.l.b16 %v318
        %v456 = vunpack.c.h.b16 %v318
        %v457 = vunpack.c.l.b16 %v319
        %v458 = vunpack.c.h.b16 %v319
        %v459 = vunpack.c.l.b16 %v320
        %v460 = vunpack.c.h.b16 %v320
        %v461 = vunpack.c.l.b16 %v321
        %v462 = vunpack.c.h.b16 %v321
        %v463 = vunpack.c.l.b16 %v322
        %v464 = vunpack.c.h.b16 %v322
        %v465 = vunpack.c.l.b16 %v323
        %v466 = vunpack.c.h.b16 %v323
        %v467 = vunpack.c.l.b16 %v324
        %v468 = vunpack.c.h.b16 %v324
        %v469 = vunpack.c.l.b16 %v325
        %v470 = vunpack.c.h.b16 %v325
        %v471 = vunpack.c.l.b16 %v326
        %v472 = vunpack.c.h.b16 %v326
        %v473 = vunpack.c.l.b16 %v327
        %v474 = vunpack.c.h.b16 %v327
        %v475 = vunpack.c.l.b16 %v328
        %v476 = vunpack.c.h.b16 %v328
        %v477 = vunpack.c.l.b16 %v329
        %v478 = vunpack.c.h.b16 %v329
        %v479 = vunpack.c.l.b16 %v330
        %v480 = vunpack.c.h.b16 %v330
        %v481 = vunpack.c.l.b16 %v331
        %v482 = vunpack.c.h.b16 %v331
        %v483 = vunpack.c.l.b16 %v332
        %v484 = vunpack.c.h.b16 %v332
        %v485 = vunpack.c.l.b16 %v333
        %v486 = vunpack.c.h.b16 %v333
        %v487 = vunpack.c.l.b16 %v334
        %v488 = vunpack.c.h.b16 %v334
        %v489 = vunpack.c.l.b16 %v335
        %v490 = vunpack.c.h.b16 %v335
        %v491 = vunpack.c.l.b16 %v336
        %v492 = vunpack.c.h.b16 %v336
        %v493 = vunpack.c.l.b16 %v337
        %v494 = vunpack.c.h.b16 %v337
        %v495 = vunpack.c.l.b16 %v338
        %v496 = vunpack.c.h.b16 %v338
        %v497 = vunpack.c.l.b16 %v339
        %v498 = vunpack.c.h.b16 %v339
        %v499 = vunpack.c.l.b16 %v340
        %v500 = vunpack.c.h.b16 %v340
        %v501 = vunpack.c.l.b16 %v341
        %v502 = vunpack.c.h.b16 %v341
        %v503 = vunpack.c.l.b16 %v342
        %v504 = vunpack.c.h.b16 %v342
        %v505 = vunpack.c.l.b16 %v343
        %v506 = vunpack.c.h.b16 %v343
        %v507 = vunpack.c.l.b16 %v344
        %v508 = vunpack.c.h.b16 %v344
        %v509 = vunpack.c.l.b16 %v345
        %v510 = vunpack.c.h.b16 %v345
        %v511 = vunpack.c.l.b16 %v346
        %v512 = vunpack.c.h.b16 %v346
        %v513 = vunpack.c.l.b16 %v347
        %v514 = vunpack.c.h.b16 %v347
        %v515 = vunpack.c.l.b16 %v348
        %v516 = vunpack.c.h.b16 %v348
        %v517 = vunpack.c.l.b16 %v349
        %v518 = vunpack.c.h.b16 %v349
        %v519 = vunpack.c.l.b16 %v350
        %v520 = vunpack.c.h.b16 %v350
        %v521 = vunpack.c.l.b16 %v351
        %v522 = vunpack.c.h.b16 %v351
        %v523 = vunpack.c.l.b16 %v352
        %v524 = vunpack.c.h.b16 %v352
        %v525 = vunpack.c.l.b16 %v353
        %v526 = vunpack.c.h.b16 %v353
        %v527 = vunpack.c.l.b16 %v354
        %v528 = vunpack.c.h.b16 %v354
        %v529 = vunpack.c.l.b16 %v355
        %v530 = vunpack.c.h.b16 %v355
        %v531 = vunpack.c.l.b16 %v356
        %v532 = vunpack.c.h.b16 %v356
        %v533 = vunpack.c.l.b16 %v357
        %v534 = vunpack.c.h.b16 %v357
        %v535 = vunpack.c.l.b16 %v358
        %v536 = vunpack.c.h.b16 %v358
        %v537 = vunpack.c.l.b16 %v359
        %v538 = vunpack.c.h.b16 %v359
        %v539 = vunpack.c.l.b16 %v360
        %v540 = vunpack.c.h.b16 %v360
        %v541 = vunpack.c.l.b16 %v361
        %v542 = vunpack.c.h.b16 %v361
        %v543 = vunpack.c.l.b16 %v362
        %v544 = vunpack.c.h.b16 %v362
        %v545 = vunpack.c.l.b16 %v363
        %v546 = vunpack.c.h.b16 %v363
        %v547 = vunpack.c.l.b16 %v364
        %v548 = vunpack.c.h.b16 %v364
        %v549 = vunpack.c.l.b16 %v365
        %v550 = vunpack.c.h.b16 %v365
        %v551 = vunpack.c.l.b16 %v366
        %v552 = vunpack.c.h.b16 %v366
        %v553 = vunpack.c.l.b16 %v367
        %v554 = vunpack.c.h.b16 %v367
        %v555 = vunpack.c.l.b16 %v368
        %v556 = vunpack.c.h.b16 %v368
        %v557 = vunpack.c.l.b16 %v369
        %v558 = vunpack.c.h.b16 %v369
        %v559 = vunpack.c.l.b16 %v370
        %v560 = vunpack.c.h.b16 %v370
        %v561 = vunpack.c.l.b16 %v371
        %v562 = vunpack.c.h.b16 %v371
        %v563 = vunpack.c.l.b16 %v372
        %v564 = vunpack.c.h.b16 %v372
        %v565 = vpack.c.b16 %v439, %v437
        %v566 = vpack.c.b16 %v440, %v438
        %v567 = vpack.c.b16 %v443, %v441
        %v568 = vpack.c.b16 %v444, %v442
        %v569 = vpack.c.b16 %v447, %v445
        %v570 = vpack.c.b16 %v448, %v446
        %v571 = vpack.c.b16 %v451, %v449
        %v572 = vpack.c.b16 %v452, %v450
        %v573 = vpack.c.b16 %v455, %v453
        %v574 = vpack.c.b16 %v456, %v454
        %v575 = vpack.c.b16 %v459, %v457
        %v576 = vpack.c.b16 %v460, %v458
        %v577 = vpack.c.b16 %v463, %v461
        %v578 = vpack.c.b16 %v464, %v462
        %v579 = vpack.c.b16 %v467, %v465
        %v580 = vpack.c.b16 %v468, %v466
        %v581 = vpack.c.b16 %v471, %v469
        %v582 = vpack.c.b16 %v472, %v470
        %v583 = vpack.c.b16 %v475, %v473
        %v584 = vpack.c.b16 %v476, %v474
        %v585 = vpack.c.b16 %v479, %v477
        %v586 = vpack.c.b16 %v480, %v478
        %v587 = vpack.c.b16 %v483, %v481
        %v588 = vpack.c.b16 %v484, %v482
        %v589 = vpack.c.b16 %v487, %v485
        %v590 = vpack.c.b16 %v488, %v486
        %v591 = vpack.c.b16 %v491, %v489
        %v592 = vpack.c.b16 %v492, %v490
        %v593 = vpack.c.b16 %v495, %v493
        %v594 = vpack.c.b16 %v496, %v494
        %v595 = vpack.c.b16 %v499, %v497
        %v596 = vpack.c.b16 %v500, %v498
        %v597 = vpack.c.b16 %v503, %v501
        %v598 = vpack.c.b16 %v504, %v502
        %v599 = vpack.c.b16 %v507, %v505
        %v600 = vpack.c.b16 %v508, %v506
        %v601 = vpack.c.b16 %v511, %v509
        %v602 = vpack.c.b16 %v512, %v510
        %v603 = vpack.c.b16 %v515, %v513
        %v604 = vpack.c.b16 %v516, %v514
        %v605 = vpack.c.b16 %v519, %v517
        %v606 = vpack.c.b16 %v520, %v518
        %v607 = vpack.c.b16 %v523, %v521
        %v608 = vpack.c.b16 %v524, %v522
        %v609 = vpack.c.b16 %v527, %v525
        %v610 = vpack.c.b16 %v528, %v526
        %v611 = vpack.c.b16 %v531, %v529
        %v612 = vpack.c.b16 %v532, %v530
        %v613 = vpack.c.b16 %v535, %v533
        %v614 = vpack.c.b16 %v536, %v534
        %v615 = vpack.c.b16 %v539, %v537
        %v616 = vpack.c.b16 %v540, %v538
        %v617 = vpack.c.b16 %v543, %v541
        %v618 = vpack.c.b16 %v544, %v542
        %v619 = vpack.c.b16 %v547, %v545
        %v620 = vpack.c.b16 %v548, %v546
        %v621 = vpack.c.b16 %v551, %v549
        %v622 = vpack.c.b16 %v552, %v550
        %v623 = vpack.c.b16 %v555, %v553
        %v624 = vpack.c.b16 %v556, %v554
        %v625 = vpack.c.b16 %v559, %v557
        %v626 = vpack.c.b16 %v560, %v558
        %v627 = vpack.c.b16 %v563, %v561
        %v628 = vpack.c.b16 %v564, %v562
        %693 = vmatprep.subr.bf16.mxu0 %v580
        %694 = vmatpush1.bf16.msra.mxu0 %v579
        %695 = vmatprep.subr.bf16.mxu0 %v578
        %696 = vmatpush1.bf16.msra.mxu0 %v577
        %697 = vmatprep.subr.bf16.mxu0 %v576
        %698 = vmatpush1.bf16.msra.mxu0 %v575
        %699 = vmatprep.subr.bf16.mxu0 %v574
        %700 = vmatpush1.bf16.msra.mxu0 %v573
        %701 = vmatprep.subr.bf16.mxu0 %v572
        %702 = vmatpush1.bf16.msra.mxu0 %v571
        %703 = vmatprep.subr.bf16.mxu0 %v570
        %704 = vmatpush1.bf16.msra.mxu0 %v569
        %705 = vmatprep.subr.bf16.mxu0 %v568
        %706 = vmatpush1.bf16.msra.mxu0 %v567
        %707 = vmatprep.subr.bf16.mxu0 %v566
        %708 = vmatpush1.bf16.msra.mxu0 %v565
        %709 = vmatprep.subr.bf16.mxu0 %v596
        %710 = vmatpush2.bf16.msra.mxu0 %v595
        %711 = vmatprep.subr.bf16.mxu0 %v594
        %712 = vmatpush2.bf16.msra.mxu0 %v593
        %713 = vmatprep.subr.bf16.mxu0 %v592
        %714 = vmatpush2.bf16.msra.mxu0 %v591
        %715 = vmatprep.subr.bf16.mxu0 %v590
        %716 = vmatpush2.bf16.msra.mxu0 %v589
        %717 = vmatprep.subr.bf16.mxu0 %v588
        %718 = vmatpush2.bf16.msra.mxu0 %v587
        %719 = vmatprep.subr.bf16.mxu0 %v586
        %720 = vmatpush2.bf16.msra.mxu0 %v585
        %721 = vmatprep.subr.bf16.mxu0 %v584
        %722 = vmatpush2.bf16.msra.mxu0 %v583
        %723 = vmatprep.subr.bf16.mxu0 %v582
        %724 = vmatpush2.bf16.msra.mxu0 %v581
        %725 = vmatprep.mubr.bf16.mxu0 %v306
        %726 = vmatmul.mubr.bf16.gmra.mxu0 %v305
        %v727 = vpop.f32.mrf.mxu0
        %v728 = vadd.f32 0.0, %v727
        %v729 = vpop.f32.mrf.mxu0
        %v730 = vadd.f32 0.0, %v729
        %v731 = vpop.f32.mrf.mxu0
        %v732 = vadd.f32 0.0, %v731
        %v733 = vpop.f32.mrf.mxu0
        %v734 = vadd.f32 0.0, %v733
        %735 = vdwg.mxu0
        %736 = vmatprep.subr.bf16.mxu0 %v612
        %737 = vmatpush1.bf16.msra.mxu0 %v611
        %738 = vmatprep.subr.bf16.mxu0 %v610
        %739 = vmatpush1.bf16.msra.mxu0 %v609
        %740 = vmatprep.subr.bf16.mxu0 %v608
        %741 = vmatpush1.bf16.msra.mxu0 %v607
        %742 = vmatprep.subr.bf16.mxu0 %v606
        %743 = vmatpush1.bf16.msra.mxu0 %v605
        %744 = vmatprep.subr.bf16.mxu0 %v604
        %745 = vmatpush1.bf16.msra.mxu0 %v603
        %746 = vmatprep.subr.bf16.mxu0 %v602
        %747 = vmatpush1.bf16.msra.mxu0 %v601
        %748 = vmatprep.subr.bf16.mxu0 %v600
        %749 = vmatpush1.bf16.msra.mxu0 %v599
        %750 = vmatprep.subr.bf16.mxu0 %v598
        %751 = vmatpush1.bf16.msra.mxu0 %v597
        %752 = vmatprep.subr.bf16.mxu0 %v628
        %753 = vmatpush2.bf16.msra.mxu0 %v627
        %754 = vmatprep.subr.bf16.mxu0 %v626
        %755 = vmatpush2.bf16.msra.mxu0 %v625
        %756 = vmatprep.subr.bf16.mxu0 %v624
        %757 = vmatpush2.bf16.msra.mxu0 %v623
        %758 = vmatprep.subr.bf16.mxu0 %v622
        %759 = vmatpush2.bf16.msra.mxu0 %v621
        %760 = vmatprep.subr.bf16.mxu0 %v620
        %761 = vmatpush2.bf16.msra.mxu0 %v619
        %762 = vmatprep.subr.bf16.mxu0 %v618
        %763 = vmatpush2.bf16.msra.mxu0 %v617
        %764 = vmatprep.subr.bf16.mxu0 %v616
        %765 = vmatpush2.bf16.msra.mxu0 %v615
        %766 = vmatprep.subr.bf16.mxu0 %v614
        %767 = vmatpush2.bf16.msra.mxu0 %v613
        %768 = vmatprep.mubr.bf16.mxu0 %v308
        %769 = vmatmul.mubr.bf16.gmra.mxu0 %v307
        %v770 = vpop.f32.mrf.mxu0
        %v771 = vadd.f32 %v728, %v770
        %v772 = vpop.f32.mrf.mxu0
        %v773 = vadd.f32 %v730, %v772
        %v774 = vpop.f32.mrf.mxu0
        %v775 = vadd.f32 %v732, %v774
        %v776 = vpop.f32.mrf.mxu0
        %v777 = vadd.f32 %v734, %v776
        %778 = vdwg.mxu0
        %v779 = vadd.f32 %v293, %v771
        %v780 = vadd.f32 %v294, %v773
        %v781 = vadd.f32 %v295, %v775
        %v782 = vadd.f32 %v296, %v777
        %783 = vst [vmem:[#allocation2] sm:$0xff] %v779
        %784 = vst [vmem:[#allocation2 + $0x8] sm:$0xff] %v780
        %785 = vst [vmem:[#allocation2 + $0x10] sm:$0xff] %v781
        %786 = vst [vmem:[#allocation2 + $0x18] sm:$0xff] %v782
        // Predicated region
        $region49: #{tpu_custom_call.1} parent=31 // pred_check
          %p787 = pneg %p285
        $region50: #{tpu_custom_call.1} parent=31 // pred_check_branch
          %789 = sbr.rel (%p787) target = $region52
        $region51: #{tpu_custom_call.1} parent=31 // pred_region
          %v790 = vld [vmem:[#allocation2] sm:$0xff]
          %v791 = vld [vmem:[#allocation2 + $0x8] sm:$0xff]
          %v792 = vld [vmem:[#allocation2 + $0x10] sm:$0xff]
          %v793 = vld [vmem:[#allocation2 + $0x18] sm:$0xff]
          %v794 = vld [vmem:[%s250] sm:$0x3]
          %v796 = vlaneseq
          %v797 = vshrl.u32 %v796, 7
          %v798 = vsub.s32 0, %v797
          %v799 = vrot.slane %v794, %v798
          %v800 = vlaneseq
          %v801 = vshrl.u32 %v800, 7
          %v802 = vsub.s32 1, %v801
          %v803 = vrot.slane %v794, %v802
          %v806 = vadd.f32 %v790, %v799
          %v807 = vadd.f32 %v791, %v803
          %v808 = vadd.f32 %v792, %v799
          %v809 = vadd.f32 %v793, %v803
          %810 = vst [vmem:[%s277] sm:$0xff] %v806
          %811 = vst [vmem:[%s277 + $0x8] sm:$0xff] %v807
          %812 = vst [vmem:[%s277 + $0x10] sm:$0xff] %v808
          %813 = vst [vmem:[%s277 + $0x18] sm:$0xff] %v809
        $region52: #{tpu_custom_call.1} parent=31 // pred_fallthru
          _
        %s814 = sand.u32 %s132, 1
        %s815 = scalar_lea.sflag [#allocation5], %s814
        %s816 = sand.u32 %s132, 1
        %s817 = smul.addr %s816, 32
        %s818 = scalar_lea.vmem [#allocation9], %s817
        // Predicated region
        $region53: #{tpu_custom_call.1} parent=31 // pred_check
          %p819 = pneg %p142
        $region54: #{tpu_custom_call.1} parent=31 // pred_check_branch
          %821 = sbr.rel (%p819) target = $region56
        $region55: #{tpu_custom_call.1} parent=31 // pred_region
          %s822 = smul.u32 2, %s26
          %s823 = smul.u32 2, %s27
          %s825 = ssub.s32 512, 512
          %826 = vsyncadd %s815, %s825
          %s827 = smul.addr %s822, 12
          %s828 = sadd.s32 %s823, %s827
          %s829 = smul.addr %s828, 128
          %s830 = scalar_lea.hbm %s3, %s829
          %s831 = sshll.u32 %s818, 4
          %s832 = int_to_ptr.vmem [resolvable:$true] %s831
          %837 = dma.vmem_to_hbm [thread:$0]  %s832, 512, %s830, %s815, 256, 1536, 16
        $region56: #{tpu_custom_call.1} parent=31 // pred_fallthru
          _
      $region32: #{tpu_custom_call.1} parent=5 // pred_fallthru
        _
      %p838 = scmp.le.s32.totalorder 2, %s16
      // Predicated region
      $region57: #{tpu_custom_call.1} parent=5 // pred_check
        %p839 = pneg %p838
      $region58: #{tpu_custom_call.1} parent=5 // pred_check_branch
        %841 = sbr.rel (%p839) target = $region60
      $region59: #{tpu_custom_call.1} parent=5 // pred_region
        %s842 = ssub.s32 %s16, 2
        // Predicated region
        $region61: #{tpu_custom_call.1} parent=59 // pred_check
          %p843 = pneg %p148
        $region62: #{tpu_custom_call.1} parent=59 // pred_check_branch
          %845 = sbr.rel (%p843) target = $region64
        $region63: #{tpu_custom_call.1} parent=59 // pred_region
          %s846 = sand.u32 %s133, 1
          %s847 = scalar_lea.sflag [#allocation5], %s846
          %s848 = sand.u32 %s133, 1
          %s849 = smul.addr %s848, 32
          %s850 = scalar_lea.vmem [#allocation9], %s849
          %851 = dma.done %s847, 512
        $region64: #{tpu_custom_call.1} parent=59 // pred_fallthru
          _
      $region60: #{tpu_custom_call.1} parent=5 // pred_fallthru
        _
    $region6: #{tpu_custom_call.1} parent=1 // loop_footer
      %s20 = sadd.s32 1, %s16
    $region7: #{tpu_custom_call.1} parent=1 // loop_footer_branch
      %15 = sbr.rel target = $region3
    $region8: #{tpu_custom_call.1} parent=1 // loop_exit
      _
    %852 = vsyncpa [#allocation4], 1
    %s853 = scalar_lea.sflag [#allocation4], 1
    %854 = vsyncpa %s853, 1
    %855 = vsyncpa [#allocation7], 1
    %s856 = scalar_lea.sflag [#allocation7], 1
    %857 = vsyncpa %s856, 1
    %858 = vsyncpa [#allocation5], 1
    %s859 = scalar_lea.sflag [#allocation5], 1
    %860 = vsyncpa %s859, 1

</llo_original>
